<compile_context>
chip_gen: v6e
topology: v6e:2x2x1
jax: 0.10.0
libtpu: 0.0.40
codegen_flags: <defaults>
</compile_context>

<pallas_src>
import numpy as np
import jax
import jax.numpy as jnp
from jax.experimental import pallas as pl
from jax.experimental.pallas import tpu as pltpu


def _round_up(x, m):
    return (x + m - 1) // m * m


def _tpu_compiler_params(**kwargs):
    # Mosaic params only make sense when actually compiling for TPU; on the
    # CPU/interpret fallback they are unnecessary.
    try:
        if jax.default_backend() == "tpu":
            return pltpu.CompilerParams(**kwargs)
    except Exception:  # pragma: no cover
        pass
    return None


# ---------------------------------------------------------------------------
# Kernel 1: per-graph max pooling (maxpool == 1 branch)
#   global_info[g, :h]      = max over graph g's node rows of cat(ent, mem)
#   global_info[g, h:2h]    = max over graph g's edge rows of cat(rel, relm)
#   global_info[g, 2h:Fp]   = 0 (lane padding)
# Grid: (graph tiles [parallel], row blocks [arbitrary, reduction]).
# The output block is resident across the row-block axis and accumulates a
# running maximum (init at r == 0).
# ---------------------------------------------------------------------------
def _pool_kernel(node_ref, edge_ref, out_ref):
    r = pl.program_id(1)
    h = node_ref.shape[2]           # feature width (== h_dim)
    fp = out_ref.shape[1]           # lane-padded output width (>= 2*h)

    nmax = jnp.max(node_ref[...], axis=1)   # (TG, h)
    emax = jnp.max(edge_ref[...], axis=1)   # (TG, h)

    @pl.when(r == 0)
    def _init():
        out_ref[:, :h] = nmax
        out_ref[:, h:2 * h] = emax
        if fp > 2 * h:
            out_ref[:, 2 * h:] = jnp.zeros(
                (out_ref.shape[0], fp - 2 * h), jnp.float32)

    @pl.when(r > 0)
    def _accum():
        out_ref[:, :h] = jnp.maximum(out_ref[:, :h], nmax)
        out_ref[:, h:2 * h] = jnp.maximum(out_ref[:, h:2 * h], emax)


def segment_max_pool(node_feats, edge_feats, out_width, *, row_tile,
                     graph_tile=8):
    gp, rpad, h = node_feats.shape
    assert edge_feats.shape == (gp, rpad, h)
    assert gp % graph_tile == 0 and rpad % row_tile == 0
    assert out_width >= 2 * h
    grid = (gp // graph_tile, rpad // row_tile)
    return pl.pallas_call(
        _pool_kernel,
        grid=grid,
        in_specs=[
            pl.BlockSpec((graph_tile, row_tile, h), lambda g, r: (g, r, 0)),
            pl.BlockSpec((graph_tile, row_tile, h), lambda g, r: (g, r, 0)),
        ],
        out_specs=pl.BlockSpec((graph_tile, out_width), lambda g, r: (g, 0)),
        out_shape=jax.ShapeDtypeStruct((gp, out_width), jnp.float32),
        compiler_params=_tpu_compiler_params(
            dimension_semantics=("parallel", "arbitrary"),
            vmem_limit_bytes=48 * 1024 * 1024),
    )(node_feats, edge_feats)


# ---------------------------------------------------------------------------
# Kernel 2: embed_seq_tensor row gather + inverted dropout.
#   out[i, :] = keep_mask[i, :] * global_info[idx[i], :]   if idx[i] >= 0
#             = 0                                          otherwise
# The pooled table stays resident in VMEM (constant index map); the index
# vector sits in SMEM; output rows are written per 8-row lane-dense block.
# ---------------------------------------------------------------------------
def _gather_dropout_kernel(idx_ref, glob_ref, mask_ref, out_ref):
    tb = out_ref.shape[0]
    base = pl.program_id(0) * tb
    for j in range(tb):                           # short static unroll
        t = idx_ref[base + j]                     # SMEM scalar read
        row = glob_ref[pl.ds(jnp.maximum(t, 0), 1), :]   # (1, Fp) dynamic row
        row = jnp.where(t >= 0, row, 0.0)
        out_ref[j:j + 1, :] = row * mask_ref[j:j + 1, :]


def seq_gather_dropout(idx, glob, keep_mask, *, row_block=8):
    bsp, fp = keep_mask.shape
    gp = glob.shape[0]
    assert glob.shape[1] == fp and bsp % row_block == 0
    return pl.pallas_call(
        _gather_dropout_kernel,
        grid=(bsp // row_block,),
        in_specs=[
            pl.BlockSpec(memory_space=pltpu.MemorySpace.SMEM),       # idx
            pl.BlockSpec((gp, fp), lambda i: (0, 0)),                # glob
            pl.BlockSpec((row_block, fp), lambda i: (i, 0)),         # mask
        ],
        out_specs=pl.BlockSpec((row_block, fp), lambda i: (i, 0)),
        out_shape=jax.ShapeDtypeStruct((bsp, fp), jnp.float32),
        compiler_params=_tpu_compiler_params(
            dimension_semantics=("parallel",),
            vmem_limit_bytes=48 * 1024 * 1024),
    )(idx, glob, keep_mask)


# ---------------------------------------------------------------------------
# Forward wrapper: replicates aggregator_event.forward control flow on host,
# runs the hot paths (segment max pooling, row gather + dropout) in Pallas.
# ---------------------------------------------------------------------------
def aggregator_event_forward(t_list, ent_memory, rel_memory, ent_embeds,
                             rel_embeds, graph_dict, *, h_dim, seq_len,
                             dropout_p, maxpool=1, rng_key=None):
    assert maxpool == 1  # mean-pool branch not exercised (default maxpool=1)
    times = sorted(graph_dict.keys())
    time_unit = times[1] - times[0]  # kept for parity with reference, unused
    del time_unit

    # nonzero_idx / t_list[nonzero_idx]
    t_list = [int(t) for t in np.asarray(t_list) if int(t) != 0]
    time_list, len_non_zero = [], []
    for tim in t_list:
        length = times.index(tim)
        if seq_len <= length:
            time_list.append(times[length - seq_len:length])
            len_non_zero.append(seq_len)
        else:
            time_list.append(times[:length])
            len_non_zero.append(length)

    unique_t = sorted(set(t for tl in time_list for t in tl))
    assert unique_t, "all query times have empty histories"
    time_to_idx = {t: i for i, t in enumerate(unique_t)}
    g_list = [graph_dict[t] for t in unique_t]
    G = len(g_list)

    node_counts = [len(g["node_ids"]) for g in g_list]
    edge_counts = [len(g["edge_types"]) for g in g_list]
    assert min(node_counts) > 0 and min(edge_counts) > 0, \
        "empty graph: dgl.max_nodes/max_edges would be ill-defined"

    # ---- contiguous padded per-graph layout (replaces dense segment masks) -
    graph_tile = 8
    gp = _round_up(G, graph_tile)
    max_rows = max(max(node_counts), max(edge_counts))
    row_tile = 512 if max_rows > 512 else _round_up(max_rows, 8)
    rpad = _round_up(max_rows, row_tile)

    node_idx = np.zeros((gp, rpad), np.int32)
    edge_idx = np.zeros((gp, rpad), np.int32)
    for g, graph in enumerate(g_list):
        ids = np.asarray(graph["node_ids"], np.int32)
        ets = np.asarray(graph["edge_types"], np.int32)
        node_idx[g, :len(ids)] = ids
        node_idx[g, len(ids):] = ids[0]    # duplicate-row padding: max-safe
        edge_idx[g, :len(ets)] = ets
        edge_idx[g, len(ets):] = ets[0]
    # (graphs g >= G keep index 0; their pooled rows are never gathered)

    # Embedding gathers + ent|mem / rel|mem feature concat (host glue).
    node_feats = jnp.concatenate(
        [ent_embeds[node_idx], ent_memory[node_idx]], axis=-1)   # (Gp,Rpad,h)
    edge_feats = jnp.concatenate(
        [rel_embeds[edge_idx], rel_memory[edge_idx]], axis=-1)   # (Gp,Rpad,h)

    f = 2 * h_dim                      # width of cat(max_nodes, max_edges)
    fp = _round_up(f, 128)             # lane-dense padded width

    # Hot path 1: tiled segment max pool -> (Gp, Fp)
    global_info = segment_max_pool(node_feats, edge_feats, fp,
                                   row_tile=row_tile, graph_tile=graph_tile)

    # ---- gather indices for embed_seq_tensor rows (-1 => zero/pad row) -----
    B = len(len_non_zero)
    bs = B * seq_len
    row_block = 8
    bsp = _round_up(max(bs, row_block), row_block)
    idx = np.full((bsp,), -1, np.int32)
    for i, tl in enumerate(time_list):
        for j, t in enumerate(tl):
            idx[i * seq_len + j] = time_to_idx[t]

    # Inverted dropout keep-mask (training-mode nn.Dropout), host-generated.
    if rng_key is None:
        rng_key = jax.random.PRNGKey(0)
    if dropout_p > 0.0:
        keep = jax.random.bernoulli(rng_key, 1.0 - dropout_p, (bsp, fp))
        keep_mask = keep.astype(jnp.float32) / (1.0 - dropout_p)
    else:
        keep_mask = jnp.ones((bsp, fp), jnp.float32)

    # Hot path 2: VMEM-resident row gather + dropout, lane-dense output.
    seq_flat = seq_gather_dropout(jnp.asarray(idx), global_info, keep_mask,
                                  row_block=row_block)
    embed_seq_tensor = seq_flat[:bs, :f].reshape(B, seq_len, f)
    return embed_seq_tensor, len_non_zero


if __name__ == "__main__":
    # Small, deterministic synthetic configuration.
    h_dim = 32
    D = h_dim // 2          # ent/rel embedding width (concat -> h_dim)
    dropout_p = 0.2
    num_nodes_vocab = 20    # num_nodes
    num_rels = 10
    seq_len = 4
    # sentence_size / text_embedding_size exist in __init__ but the text path
    # is unused in this forward (see TODOs at top).

    key = jax.random.PRNGKey(0)
    k1, k2, k3, k4, k5 = jax.random.split(key, 5)
    ent_embeds = jax.random.normal(k1, (num_nodes_vocab, D), jnp.float32)
    ent_memory = jax.random.normal(k2, (num_nodes_vocab, D), jnp.float32)
    rel_embeds = jax.random.normal(k3, (num_rels, D), jnp.float32)
    rel_memory = jax.random.normal(k4, (num_rels, D), jnp.float32)

    # Synthetic graph_dict: time -> {node ids, edge types}.
    rng = np.random.RandomState(0)
    times = [0, 3, 6, 9, 12, 15, 18, 21]
    graph_dict = {}
    for t in times:
        n = int(rng.randint(3, 6))
        m = int(rng.randint(4, 8))
        graph_dict[t] = {
            "node_ids": rng.randint(0, num_nodes_vocab, size=n).astype(np.int32),
            "edge_types": rng.randint(0, num_rels, size=m).astype(np.int32),
        }

    t_list = np.array([0, 9, 15, 0, 21], dtype=np.int64)

    embed_seq_tensor, len_non_zero = aggregator_event_forward(
        t_list, ent_memory, rel_memory, ent_embeds, rel_embeds, graph_dict,
        h_dim=h_dim, seq_len=seq_len, dropout_p=dropout_p, maxpool=1,
        rng_key=k5)

    jax.block_until_ready(embed_seq_tensor)
    assert embed_seq_tensor.shape == (len(len_non_zero), seq_len, 2 * h_dim)
    assert bool(jnp.all(jnp.isfinite(embed_seq_tensor)))
    print("KERNEL_OK")
</pallas_src>

<mosaic_0001>
module attributes {stable_mosaic.version = 11 : i64} {
  func.func @_pool_kernel(%arg0: i32, %arg1: i32, %arg2: memref<8x8x32xf32, #tpu.memory_space<vmem>>, %arg3: memref<8x8x32xf32, #tpu.memory_space<vmem>>, %arg4: memref<8x128xf32, #tpu.memory_space<vmem>>) attributes {dimension_semantics = [#tpu.dimension_semantics<arbitrary>, #tpu.dimension_semantics<arbitrary>], iteration_bounds = array<i64: 1, 1>, scalar_prefetch = 0 : i64, scratch_operands = 0 : i64, tpu.core_type = #tpu.core_type<tc>, window_params = [{transform_indices = @transform_0, window_bounds = array<i64: 8, 8, 32>}, {transform_indices = @transform_1, window_bounds = array<i64: 8, 8, 32>}, {transform_indices = @transform_2, window_bounds = array<i64: 8, 128>}]} {
    %c0 = arith.constant 0 : index
    %c0_0 = arith.constant 0 : index
    %c0_1 = arith.constant 0 : index
    %0 = vector.load %arg2[%c0, %c0_0, %c0_1] : memref<8x8x32xf32, #tpu.memory_space<vmem>>, vector<8x8x32xf32>
    %cst = arith.constant dense<0xFF800000> : vector<8x32xf32>
    %1 = vector.multi_reduction <maximumf>, %0, %cst [1] : vector<8x8x32xf32> to vector<8x32xf32>
    %c0_2 = arith.constant 0 : index
    %c0_3 = arith.constant 0 : index
    %c0_4 = arith.constant 0 : index
    %2 = vector.load %arg3[%c0_2, %c0_3, %c0_4] : memref<8x8x32xf32, #tpu.memory_space<vmem>>, vector<8x8x32xf32>
    %cst_5 = arith.constant dense<0xFF800000> : vector<8x32xf32>
    %3 = vector.multi_reduction <maximumf>, %2, %cst_5 [1] : vector<8x8x32xf32> to vector<8x32xf32>
    %c0_i32 = arith.constant 0 : i32
    %4 = arith.cmpi eq, %arg1, %c0_i32 : i32
    %5 = arith.extui %4 : i1 to i32
    %c0_i32_6 = arith.constant 0 : i32
    %6 = arith.cmpi ne, %5, %c0_i32_6 : i32
    scf.if %6 {
      %c0_9 = arith.constant 0 : index
      %c0_10 = arith.constant 0 : index
      %10 = vector.load %arg4[%c0_9, %c0_10] : memref<8x128xf32, #tpu.memory_space<vmem>>, vector<8x32xf32>
      tpu.vector_store %arg4[%c0_9, %c0_10], %1 {strides = array<i32>} : memref<8x128xf32, #tpu.memory_space<vmem>>, vector<8x32xf32>,
      %c0_11 = arith.constant 0 : index
      %c32 = arith.constant 32 : index
      %11 = vector.load %arg4[%c0_11, %c32] : memref<8x128xf32, #tpu.memory_space<vmem>>, vector<8x32xf32>
      tpu.vector_store %arg4[%c0_11, %c32], %3 {strides = array<i32>} : memref<8x128xf32, #tpu.memory_space<vmem>>, vector<8x32xf32>,
      %cst_12 = arith.constant 0.000000e+00 : f32
      %12 = vector.broadcast %cst_12 : f32 to vector<8x64xf32>
      %c0_13 = arith.constant 0 : index
      %c64 = arith.constant 64 : index
      %13 = vector.load %arg4[%c0_13, %c64] : memref<8x128xf32, #tpu.memory_space<vmem>>, vector<8x64xf32>
      tpu.vector_store %arg4[%c0_13, %c64], %12 {strides = array<i32>} : memref<8x128xf32, #tpu.memory_space<vmem>>, vector<8x64xf32>,
    } else {
    }
    %c0_i32_7 = arith.constant 0 : i32
    %7 = arith.cmpi sgt, %arg1, %c0_i32_7 : i32
    %8 = arith.extui %7 : i1 to i32
    %c0_i32_8 = arith.constant 0 : i32
    %9 = arith.cmpi ne, %8, %c0_i32_8 : i32
    scf.if %9 {
      %c0_9 = arith.constant 0 : index
      %c0_10 = arith.constant 0 : index
      %10 = vector.load %arg4[%c0_9, %c0_10] : memref<8x128xf32, #tpu.memory_space<vmem>>, vector<8x32xf32>
      %11 = arith.maximumf %10, %1 : vector<8x32xf32>
      %c0_11 = arith.constant 0 : index
      %c0_12 = arith.constant 0 : index
      %12 = vector.load %arg4[%c0_11, %c0_12] : memref<8x128xf32, #tpu.memory_space<vmem>>, vector<8x32xf32>
      tpu.vector_store %arg4[%c0_11, %c0_12], %11 {strides = array<i32>} : memref<8x128xf32, #tpu.memory_space<vmem>>, vector<8x32xf32>,
      %c0_13 = arith.constant 0 : index
      %c32 = arith.constant 32 : index
      %13 = vector.load %arg4[%c0_13, %c32] : memref<8x128xf32, #tpu.memory_space<vmem>>, vector<8x32xf32>
      %14 = arith.maximumf %13, %3 : vector<8x32xf32>
      %c0_14 = arith.constant 0 : index
      %c32_15 = arith.constant 32 : index
      %15 = vector.load %arg4[%c0_14, %c32_15] : memref<8x128xf32, #tpu.memory_space<vmem>>, vector<8x32xf32>
      tpu.vector_store %arg4[%c0_14, %c32_15], %14 {strides = array<i32>} : memref<8x128xf32, #tpu.memory_space<vmem>>, vector<8x32xf32>,
    } else {
    }
    return
  }
  func.func @transform_0(%arg0: i32, %arg1: i32) -> (i32, i32, i32) {
    %c0_i32 = arith.constant 0 : i32
    %c0_i32_0 = arith.constant 0 : i32
    return %arg0, %arg1, %c0_i32 : i32, i32, i32
  }
  func.func @transform_1(%arg0: i32, %arg1: i32) -> (i32, i32, i32) {
    %c0_i32 = arith.constant 0 : i32
    %c0_i32_0 = arith.constant 0 : i32
    return %arg0, %arg1, %c0_i32 : i32, i32, i32
  }
  func.func @transform_2(%arg0: i32, %arg1: i32) -> (i32, i32) {
    %c0_i32 = arith.constant 0 : i32
    %c0_i32_0 = arith.constant 0 : i32
    return %arg0, %c0_i32 : i32, i32
  }
}

</mosaic_0001>

<llo_original>
// kernel: tpu_custom_call.1
$region0: #{tpu_custom_call.1}
  #allocation0 [shape = 'u32[]', space=smem, size = 0x4, offset = 0x4, fixed_abs, tag = 'smem constant byte address 0x4 - core index']
  #allocation1 [shape = 'u32[144,128]{1,0:T(1,128)}', space=vmem, size = 0x12000, scoped, tag = 'internal scratch']
  %s0 = inlined_call_operand.hbm [shape: f32[8,8,32], index: 0, kind: input, shape index: {}]
  %s1 = inlined_call_operand.hbm [shape: f32[8,8,32], index: 1, kind: input, shape index: {}]
  %s2 = inlined_call_operand.hbm [shape: f32[8,128], index: 2, kind: output, shape index: {}]
  %s3 = sld [smem:[#allocation0]]
  $region34: #{tpu_custom_call.1} parent=0
    _
  %s5 = ssub.s32 1, %s3
  %s6 = scalar_select 0, %s5, %s3
  $region1: #{tpu_custom_call.1} parent=0
    #allocation2 [shape = 'u8[32768]{0}', space=vmem, size = 0x8000, scoped, tag = 'input window, operand 0, single buffered']
    #allocation3 [shape = 's32[1]{0}', space=sflag, size = 0x4, scoped, tag = 'scoped memory for tpu_custom_call.1']
    #allocation4 [shape = 's32[1]{0}', space=sflag, size = 0x4, scoped, tag = 'scoped memory for tpu_custom_call.1']
    #allocation5 [shape = 'u8[32768]{0}', space=vmem, size = 0x8000, scoped, tag = 'input window, operand 1, single buffered']
    #allocation6 [shape = 's32[1]{0}', space=sflag, size = 0x4, scoped, tag = 'scoped memory for tpu_custom_call.1']
    #allocation7 [shape = 'u8[4096]{0}', space=vmem, size = 0x1000, scoped, tag = 'output window, operand 0, single buffered']
    %7 = vsyncpa [#allocation3], 0
    %8 = vsyncpa [#allocation6], 0
    %9 = vsyncpa [#allocation4], 0
    // Predicated region
    $region2: #{tpu_custom_call.1} parent=1 // pred_check
      _
    $region3: #{tpu_custom_call.1} parent=1 // pred_check_branch
      %11 = sbr.rel (0) target = $region5
    $region4: #{tpu_custom_call.1} parent=1 // pred_region
      %s13 = ssub.s32 1024, 1024
      %14 = vsyncadd [#allocation3], %s13
      %s15 = sshll.u32 [#allocation2], 4
      %s16 = int_to_ptr.vmem [resolvable:$true] %s15
      %21 = dma.hbm_to_vmem [thread:$0]  %s0, 1024, %s16, [#allocation3], 128, 128, 8
    $region5: #{tpu_custom_call.1} parent=1 // pred_fallthru
      _
    // Predicated region
    $region6: #{tpu_custom_call.1} parent=1 // pred_check
      _
    $region7: #{tpu_custom_call.1} parent=1 // pred_check_branch
      %23 = sbr.rel (0) target = $region9
    $region8: #{tpu_custom_call.1} parent=1 // pred_region
      %s25 = ssub.s32 1024, 1024
      %26 = vsyncadd [#allocation6], %s25
      %s27 = sshll.u32 [#allocation5], 4
      %s28 = int_to_ptr.vmem [resolvable:$true] %s27
      %33 = dma.hbm_to_vmem [thread:$0]  %s1, 1024, %s28, [#allocation6], 128, 128, 8
    $region9: #{tpu_custom_call.1} parent=1 // pred_fallthru
      _
    // Predicated region
    $region10: #{tpu_custom_call.1} parent=1 // pred_check
      _
    $region11: #{tpu_custom_call.1} parent=1 // pred_check_branch
      %35 = sbr.rel (0) target = $region13
    $region12: #{tpu_custom_call.1} parent=1 // pred_region
      %36 = dma.done [#allocation3], 1024
    $region13: #{tpu_custom_call.1} parent=1 // pred_fallthru
      _
    // Predicated region
    $region14: #{tpu_custom_call.1} parent=1 // pred_check
      _
    $region15: #{tpu_custom_call.1} parent=1 // pred_check_branch
      %38 = sbr.rel (0) target = $region17
    $region16: #{tpu_custom_call.1} parent=1 // pred_region
      %39 = dma.done [#allocation6], 1024
    $region17: #{tpu_custom_call.1} parent=1 // pred_fallthru
      _
    %v40 = vld [vmem:[#allocation2] sm:$0xff]
    %v41 = vld [vmem:[#allocation2 + $0x8] sm:$0xff]
    %v42 = vld [vmem:[#allocation2 + $0x10] sm:$0xff]
    %v43 = vld [vmem:[#allocation2 + $0x18] sm:$0xff]
    %v44 = vld [vmem:[#allocation2 + $0x20] sm:$0xff]
    %v45 = vld [vmem:[#allocation2 + $0x28] sm:$0xff]
    %v46 = vld [vmem:[#allocation2 + $0x30] sm:$0xff]
    %v47 = vld [vmem:[#allocation2 + $0x38] sm:$0xff]
    %vm48 = vcmask 261120
    %v49 = vsel %vm48, %v40, -inf
    %v50 = vrot.slane %v49, 4
    %v51 = vmax.f32 %v49, %v50
    %v52 = vrot.slane %v51, 2
    %v53 = vmax.f32 %v51, %v52
    %v54 = vrot.slane %v53, 1
    %v55 = vmax.f32 %v53, %v54
    %v56 = vsel %vm48, %v41, -inf
    %v57 = vrot.slane %v56, 4
    %v58 = vmax.f32 %v56, %v57
    %v59 = vrot.slane %v58, 2
    %v60 = vmax.f32 %v58, %v59
    %v61 = vrot.slane %v60, 1
    %v62 = vmax.f32 %v60, %v61
    %v63 = vsel %vm48, %v42, -inf
    %v64 = vrot.slane %v63, 4
    %v65 = vmax.f32 %v63, %v64
    %v66 = vrot.slane %v65, 2
    %v67 = vmax.f32 %v65, %v66
    %v68 = vrot.slane %v67, 1
    %v69 = vmax.f32 %v67, %v68
    %v70 = vsel %vm48, %v43, -inf
    %v71 = vrot.slane %v70, 4
    %v72 = vmax.f32 %v70, %v71
    %v73 = vrot.slane %v72, 2
    %v74 = vmax.f32 %v72, %v73
    %v75 = vrot.slane %v74, 1
    %v76 = vmax.f32 %v74, %v75
    %v77 = vsel %vm48, %v44, -inf
    %v78 = vrot.slane %v77, 4
    %v79 = vmax.f32 %v77, %v78
    %v80 = vrot.slane %v79, 2
    %v81 = vmax.f32 %v79, %v80
    %v82 = vrot.slane %v81, 1
    %v83 = vmax.f32 %v81, %v82
    %v84 = vsel %vm48, %v45, -inf
    %v85 = vrot.slane %v84, 4
    %v86 = vmax.f32 %v84, %v85
    %v87 = vrot.slane %v86, 2
    %v88 = vmax.f32 %v86, %v87
    %v89 = vrot.slane %v88, 1
    %v90 = vmax.f32 %v88, %v89
    %v91 = vsel %vm48, %v46, -inf
    %v92 = vrot.slane %v91, 4
    %v93 = vmax.f32 %v91, %v92
    %v94 = vrot.slane %v93, 2
    %v95 = vmax.f32 %v93, %v94
    %v96 = vrot.slane %v95, 1
    %v97 = vmax.f32 %v95, %v96
    %v98 = vsel %vm48, %v47, -inf
    %v99 = vrot.slane %v98, 4
    %v100 = vmax.f32 %v98, %v99
    %v101 = vrot.slane %v100, 2
    %v102 = vmax.f32 %v100, %v101
    %v103 = vrot.slane %v102, 1
    %v104 = vmax.f32 %v102, %v103
    %v105 = vld [vmem:[#allocation5] sm:$0xff]
    %v106 = vld [vmem:[#allocation5 + $0x8] sm:$0xff]
    %v107 = vld [vmem:[#allocation5 + $0x10] sm:$0xff]
    %v108 = vld [vmem:[#allocation5 + $0x18] sm:$0xff]
    %v109 = vld [vmem:[#allocation5 + $0x20] sm:$0xff]
    %v110 = vld [vmem:[#allocation5 + $0x28] sm:$0xff]
    %v111 = vld [vmem:[#allocation5 + $0x30] sm:$0xff]
    %v112 = vld [vmem:[#allocation5 + $0x38] sm:$0xff]
    %v113 = vsel %vm48, %v105, -inf
    %v114 = vrot.slane %v113, 4
    %v115 = vmax.f32 %v113, %v114
    %v116 = vrot.slane %v115, 2
    %v117 = vmax.f32 %v115, %v116
    %v118 = vrot.slane %v117, 1
    %v119 = vmax.f32 %v117, %v118
    %v120 = vsel %vm48, %v106, -inf
    %v121 = vrot.slane %v120, 4
    %v122 = vmax.f32 %v120, %v121
    %v123 = vrot.slane %v122, 2
    %v124 = vmax.f32 %v122, %v123
    %v125 = vrot.slane %v124, 1
    %v126 = vmax.f32 %v124, %v125
    %v127 = vsel %vm48, %v107, -inf
    %v128 = vrot.slane %v127, 4
    %v129 = vmax.f32 %v127, %v128
    %v130 = vrot.slane %v129, 2
    %v131 = vmax.f32 %v129, %v130
    %v132 = vrot.slane %v131, 1
    %v133 = vmax.f32 %v131, %v132
    %v134 = vsel %vm48, %v108, -inf
    %v135 = vrot.slane %v134, 4
    %v136 = vmax.f32 %v134, %v135
    %v137 = vrot.slane %v136, 2
    %v138 = vmax.f32 %v136, %v137
    %v139 = vrot.slane %v138, 1
    %v140 = vmax.f32 %v138, %v139
    %v141 = vsel %vm48, %v109, -inf
    %v142 = vrot.slane %v141, 4
    %v143 = vmax.f32 %v141, %v142
    %v144 = vrot.slane %v143, 2
    %v145 = vmax.f32 %v143, %v144
    %v146 = vrot.slane %v145, 1
    %v147 = vmax.f32 %v145, %v146
    %v148 = vsel %vm48, %v110, -inf
    %v149 = vrot.slane %v148, 4
    %v150 = vmax.f32 %v148, %v149
    %v151 = vrot.slane %v150, 2
    %v152 = vmax.f32 %v150, %v151
    %v153 = vrot.slane %v152, 1
    %v154 = vmax.f32 %v152, %v153
    %v155 = vsel %vm48, %v111, -inf
    %v156 = vrot.slane %v155, 4
    %v157 = vmax.f32 %v155, %v156
    %v158 = vrot.slane %v157, 2
    %v159 = vmax.f32 %v157, %v158
    %v160 = vrot.slane %v159, 1
    %v161 = vmax.f32 %v159, %v160
    %v162 = vsel %vm48, %v112, -inf
    %v163 = vrot.slane %v162, 4
    %v164 = vmax.f32 %v162, %v163
    %v165 = vrot.slane %v164, 2
    %v166 = vmax.f32 %v164, %v165
    %v167 = vrot.slane %v166, 1
    %v168 = vmax.f32 %v166, %v167
    %p169 = scmp.eq.s32.totalorder 0, 0
    // Predicated region
    $region18: #{tpu_custom_call.1} parent=1 // pred_check
      %p170 = pneg %p169
    $region19: #{tpu_custom_call.1} parent=1 // pred_check_branch
      %172 = sbr.rel (%p170) target = $region21
    $region20: #{tpu_custom_call.1} parent=1 // pred_region
      %vm181 = vcmask 1041409
      %v182 = vsel %vm181, %v62, %v55
      %vm183 = vcmask 1042434
      %v184 = vsel %vm183, %v69, %v182
      %vm185 = vcmask 1043459
      %v186 = vsel %vm185, %v76, %v184
      %vm187 = vcmask 1044484
      %v188 = vsel %vm187, %v83, %v186
      %vm189 = vcmask 1045509
      %v190 = vsel %vm189, %v90, %v188
      %vm191 = vcmask 1046534
      %v192 = vsel %vm191, %v97, %v190
      %vm193 = vcmask 1047559
      %v194 = vsel %vm193, %v104, %v192
      %196 = vst.msk [vmem:[#allocation7] sm:$0xff] %vm48, %v194
      %v205 = vsel %vm181, %v126, %v119
      %v206 = vsel %vm183, %v133, %v205
      %v207 = vsel %vm185, %v140, %v206
      %v208 = vsel %vm187, %v147, %v207
      %v209 = vsel %vm189, %v154, %v208
      %v210 = vsel %vm191, %v161, %v209
      %v211 = vsel %vm193, %v168, %v210
      %212 = vrot.lane.b32.xlu0 %v211, 32
      %v213 = vpop.permute.xlu0 %212
      %vm215 = vcmask 523520
      %216 = vst.msk [vmem:[#allocation7] sm:$0xff] %vm215, %v213
      %vm217 = vcmask 1048064
      %218 = vst.msk [vmem:[#allocation7] sm:$0xff] %vm217, 0.0
    $region21: #{tpu_custom_call.1} parent=1 // pred_fallthru
      _
    %p219 = scmp.gt.s32.totalorder 0, 0
    // Predicated region
    $region22: #{tpu_custom_call.1} parent=1 // pred_check
      %p220 = pneg %p219
    $region23: #{tpu_custom_call.1} parent=1 // pred_check_branch
      %222 = sbr.rel (%p220) target = $region25
    $region24: #{tpu_custom_call.1} parent=1 // pred_region
      %v223 = vld [vmem:[#allocation7] sm:$0xff]
      %vm232 = vcmask 1041409
      %v233 = vsel %vm232, %v62, %v55
      %vm234 = vcmask 1042434
      %v235 = vsel %vm234, %v69, %v233
      %vm236 = vcmask 1043459
      %v237 = vsel %vm236, %v76, %v235
      %vm238 = vcmask 1044484
      %v239 = vsel %vm238, %v83, %v237
      %vm240 = vcmask 1045509
      %v241 = vsel %vm240, %v90, %v239
      %vm242 = vcmask 1046534
      %v243 = vsel %vm242, %v97, %v241
      %vm244 = vcmask 1047559
      %v245 = vsel %vm244, %v104, %v243
      %v247 = vmax.f32 %v223, %v245
      %248 = vst.msk [vmem:[#allocation7] sm:$0xff] %vm48, %v247
      %v249 = vld [vmem:[#allocation7] sm:$0xff]
      %v258 = vsel %vm232, %v126, %v119
      %v259 = vsel %vm234, %v133, %v258
      %v260 = vsel %vm236, %v140, %v259
      %v261 = vsel %vm238, %v147, %v260
      %v262 = vsel %vm240, %v154, %v261
      %v263 = vsel %vm242, %v161, %v262
      %v264 = vsel %vm244, %v168, %v263
      %265 = vrot.lane.b32.xlu0 %v264, 32
      %v266 = vpop.permute.xlu0 %265
      %v268 = vmax.f32 %v249, %v266
      %vm269 = vcmask 523520
      %270 = vst.msk [vmem:[#allocation7] sm:$0xff] %vm269, %v268
    $region25: #{tpu_custom_call.1} parent=1 // pred_fallthru
      _
    // Predicated region
    $region26: #{tpu_custom_call.1} parent=1 // pred_check
      _
    $region27: #{tpu_custom_call.1} parent=1 // pred_check_branch
      %272 = sbr.rel (0) target = $region29
    $region28: #{tpu_custom_call.1} parent=1 // pred_region
      %s274 = ssub.s32 128, 128
      %275 = vsyncadd [#allocation4], %s274
      %s277 = sshll.u32 [#allocation7], 4
      %s278 = int_to_ptr.vmem [resolvable:$true] %s277
      %280 = dma.vmem_to_hbm [thread:$0]  %s278, 128, %s2, [#allocation4]
    $region29: #{tpu_custom_call.1} parent=1 // pred_fallthru
      _
    // Predicated region
    $region30: #{tpu_custom_call.1} parent=1 // pred_check
      _
    $region31: #{tpu_custom_call.1} parent=1 // pred_check_branch
      %282 = sbr.rel (0) target = $region33
    $region32: #{tpu_custom_call.1} parent=1 // pred_region
      %283 = dma.done [#allocation4], 128
    $region33: #{tpu_custom_call.1} parent=1 // pred_fallthru
      _
    %284 = vsyncpa [#allocation3], 1
    %285 = vsyncpa [#allocation6], 1
    %286 = vsyncpa [#allocation4], 1

</llo_original>
